<compile_context>
chip_gen: v7x
topology: tpu7x:2x2x1
jax: 0.10.0
libtpu: 0.0.40
codegen_flags: <defaults>
</compile_context>

<pallas_src>
import functools

import jax
import jax.numpy as jnp
from jax.experimental import pallas as pl
from jax.experimental.pallas import tpu as pltpu

_LANE = 128
_TILE_B_MAX = 1024  # rows per grid step; amortizes ~0.35us/step, tiny vs VMEM budget


def _round_up(x, m):
    return ((x + m - 1) // m) * m


def _pad_to(x, shape):
    pads = [(0, t - s) for s, t in zip(x.shape, shape)]
    return jnp.pad(x, pads)


def _mlp_kernel(x_ref, w_in_ref, b_in_ref, w_hid_ref, b_hid_ref,
                w_out_ref, b_out_ref, o_ref, *,
                num_hidden, num_class, output_activation):
    # Input layer: [TILE_B, D_pad](bf16) @ [D_pad, H_pad](bf16) -> f32 acc, +bias, ReLU.
    h = jnp.dot(x_ref[...], w_in_ref[...],
                preferred_element_type=jnp.float32) + b_in_ref[...]
    h = jnp.maximum(h, 0.0)

    # Hidden layers. Static, small trip count (L<=4) -> unrolled Python loop at trace.
    # TODO(synk): switch to lax.fori_loop(..., unroll=True) if num_hidden grows large.
    for l in range(num_hidden):
        h = jnp.dot(h.astype(jnp.bfloat16), w_hid_ref[l],
                    preferred_element_type=jnp.float32) + b_hid_ref[l]
        h = jnp.maximum(h, 0.0)

    # Output layer: [TILE_B, H_pad] @ [H_pad, C_pad] + [1, C_pad]  (padded classes = 0).
    logits = jnp.dot(h.astype(jnp.bfloat16), w_out_ref[...],
                     preferred_element_type=jnp.float32) + b_out_ref[...]

    if output_activation == "softmax":
        # Mask padded class lanes so they do not contribute to the normalizer.
        if num_class < logits.shape[-1]:
            col = jax.lax.broadcasted_iota(jnp.int32, logits.shape, 1)
            logits = jnp.where(col < num_class, logits, jnp.float32(-1e30))
        m = jnp.max(logits, axis=-1, keepdims=True)           # XLU reduce
        e = jnp.exp(logits - m)                                # EUP
        denom = jnp.sum(e, axis=-1, keepdims=True)             # XLU reduce
        logits = e * pl.reciprocal(denom, approx=True)          # EUP slot, off VPU path
    # output_activation == "none" -> raw logits (padded lanes are exactly 0)

    o_ref[...] = logits


def llm4mol_forward(features, params, *, num_hidden, num_class,
                    output_activation="none", tile_b_max=_TILE_B_MAX):
    """LLM4Mol hot path (the MLP classifier head) as a single Pallas kernel."""
    w_in, b_in, w_hid, b_hid, w_out, b_out = params
    B, D = features.shape
    H = w_in.shape[1]
    L = w_hid.shape[0]

    d_pad = _round_up(max(D, 1), _LANE)
    h_pad = _round_up(max(H, 1), _LANE)
    c_pad = _round_up(max(num_class, 1), _LANE)

    # Batch tile: multiple of 8 sublanes, capped; pad the batch to a tile multiple.
    tile_b = min(_round_up(tile_b_max, 8), _round_up(B, 8))
    b_pad = _round_up(B, tile_b)

    # Lane-dense zero padding; matmul operands pre-cast to bf16 (halves HBM traffic
    # for the streamed features, keeps the MXU on its bf16 fast path). Biases stay f32.
    x_p = _pad_to(features, (b_pad, d_pad)).astype(jnp.bfloat16)
    w_in_p = _pad_to(w_in, (d_pad, h_pad)).astype(jnp.bfloat16)
    b_in_p = _pad_to(b_in, (1, h_pad)).astype(jnp.float32)
    w_hid_p = _pad_to(w_hid, (L, h_pad, h_pad)).astype(jnp.bfloat16)
    b_hid_p = _pad_to(b_hid, (L, 1, h_pad)).astype(jnp.float32)
    w_out_p = _pad_to(w_out, (h_pad, c_pad)).astype(jnp.bfloat16)
    b_out_p = _pad_to(b_out, (1, c_pad)).astype(jnp.float32)

    kernel = functools.partial(
        _mlp_kernel, num_hidden=num_hidden, num_class=num_class,
        output_activation=output_activation)

    out_padded = pl.pallas_call(
        kernel,
        out_shape=jax.ShapeDtypeStruct((b_pad, c_pad), jnp.float32),
        grid=(pl.cdiv(b_pad, tile_b),),
        in_specs=[
            pl.BlockSpec((tile_b, d_pad), lambda i: (i, 0)),       # features: streamed
            pl.BlockSpec((d_pad, h_pad), lambda i: (0, 0)),        # w_in: resident
            pl.BlockSpec((1, h_pad), lambda i: (0, 0)),            # b_in: resident
            pl.BlockSpec((L, h_pad, h_pad), lambda i: (0, 0, 0)),  # w_hid: resident
            pl.BlockSpec((L, 1, h_pad), lambda i: (0, 0, 0)),      # b_hid: resident
            pl.BlockSpec((h_pad, c_pad), lambda i: (0, 0)),        # w_out: resident
            pl.BlockSpec((1, c_pad), lambda i: (0, 0)),            # b_out: resident
        ],
        out_specs=pl.BlockSpec((tile_b, c_pad), lambda i: (i, 0)),
        compiler_params=pltpu.CompilerParams(
            dimension_semantics=("parallel",)),                    # megacore over batch
    )(x_p, w_in_p, b_in_p, w_hid_p, b_hid_p, w_out_p, b_out_p)

    return out_padded[:B, :num_class]


def init_mlp_params(key, input_dim, hidden_dim, num_hidden, num_class):
    """Deterministic synthetic parameter init (matches nn.Linear shapes)."""
    ks = jax.random.split(key, 6)
    w_in = jax.random.normal(ks[0], (input_dim, hidden_dim), jnp.float32) * 0.1
    b_in = jax.random.normal(ks[1], (1, hidden_dim), jnp.float32) * 0.01
    w_hid = jax.random.normal(ks[2], (max(num_hidden, 1), hidden_dim, hidden_dim),
                              jnp.float32) * 0.1
    b_hid = jax.random.normal(ks[3], (max(num_hidden, 1), 1, hidden_dim),
                              jnp.float32) * 0.01
    w_out = jax.random.normal(ks[4], (hidden_dim, num_class), jnp.float32) * 0.1
    b_out = jax.random.normal(ks[5], (1, num_class), jnp.float32) * 0.01
    return (w_in, b_in, w_hid, b_hid, w_out, b_out)


def reference_forward(features, params, *, num_hidden, output_activation="none"):
    """Plain-JAX reference of the same MLP (same bf16 matmul-operand cast, f32 acc)."""
    w_in, b_in, w_hid, b_hid, w_out, b_out = params
    c = lambda a: a.astype(jnp.bfloat16)
    h = jnp.maximum(jnp.dot(c(features), c(w_in),
                            preferred_element_type=jnp.float32) + b_in, 0.0)
    for l in range(num_hidden):
        h = jnp.maximum(jnp.dot(c(h), c(w_hid[l]),
                                preferred_element_type=jnp.float32) + b_hid[l], 0.0)
    logits = jnp.dot(c(h), c(w_out), preferred_element_type=jnp.float32) + b_out
    if output_activation == "softmax":
        logits = jax.nn.softmax(logits, axis=-1)
    return logits


if __name__ == "__main__":
    # Small shapes consistent with the module: input_dim = 16 + 16 = 32.
    B = 8                # batch
    INPUT_DIM = 32       # 16 + 16 (concatenated LM features)
    HIDDEN_DIM = 32      # mlp_params['hidden_dim']
    NUM_HIDDEN = 2       # mlp_params['num_hidden_layers']
    NUM_CLASS = 4        # num_class
    OUT_ACT = "softmax"  # mlp_params['output_activation']

    key = jax.random.PRNGKey(0)
    k_feat, k_param = jax.random.split(key)

    # TODO(synk): self.lm is None in the PyTorch __init__ (no LM definition available);
    # its 32-dim feature output is fed directly as the kernel input.
    features = jax.random.normal(k_feat, (B, INPUT_DIM), jnp.float32)
    params = init_mlp_params(k_param, INPUT_DIM, HIDDEN_DIM, NUM_HIDDEN, NUM_CLASS)

    out = llm4mol_forward(features, params, num_hidden=NUM_HIDDEN,
                          num_class=NUM_CLASS, output_activation=OUT_ACT)
    out = jax.block_until_ready(out)

    ref = reference_forward(features, params, num_hidden=NUM_HIDDEN,
                            output_activation=OUT_ACT)
    assert out.shape == (B, NUM_CLASS)
    # Kernel and reference use identical bf16 matmul casts; remaining delta is the
    # approx softmax reciprocal (EUP), hence the slightly relaxed tolerance.
    assert jnp.allclose(out, ref, atol=2e-3, rtol=2e-3), float(
        jnp.max(jnp.abs(out - ref)))

    print("KERNEL_OK")
</pallas_src>

<mosaic_0001>
module attributes {stable_mosaic.version = 11 : i64} {
  func.func @_mlp_kernel(%arg0: i32, %arg1: memref<8x128xbf16, #tpu.memory_space<vmem>>, %arg2: memref<128x128xbf16, #tpu.memory_space<vmem>>, %arg3: memref<1x128xf32, #tpu.memory_space<vmem>>, %arg4: memref<2x128x128xbf16, #tpu.memory_space<vmem>>, %arg5: memref<2x1x128xf32, #tpu.memory_space<vmem>>, %arg6: memref<128x128xbf16, #tpu.memory_space<vmem>>, %arg7: memref<1x128xf32, #tpu.memory_space<vmem>>, %arg8: memref<8x128xf32, #tpu.memory_space<vmem>>) attributes {dimension_semantics = [#tpu.dimension_semantics<parallel>], iteration_bounds = array<i64: 1>, scalar_prefetch = 0 : i64, scratch_operands = 0 : i64, tpu.core_type = #tpu.core_type<tc>, window_params = [{transform_indices = @transform_0, window_bounds = array<i64: 8, 128>}, {pipeline_mode = #tpu.pipeline_mode<synchronous>, transform_indices = @transform_1, window_bounds = array<i64: 128, 128>}, {pipeline_mode = #tpu.pipeline_mode<synchronous>, transform_indices = @transform_2, window_bounds = array<i64: 1, 128>}, {pipeline_mode = #tpu.pipeline_mode<synchronous>, transform_indices = @transform_3, window_bounds = array<i64: 2, 128, 128>}, {pipeline_mode = #tpu.pipeline_mode<synchronous>, transform_indices = @transform_4, window_bounds = array<i64: 2, 1, 128>}, {pipeline_mode = #tpu.pipeline_mode<synchronous>, transform_indices = @transform_5, window_bounds = array<i64: 128, 128>}, {pipeline_mode = #tpu.pipeline_mode<synchronous>, transform_indices = @transform_6, window_bounds = array<i64: 1, 128>}, {transform_indices = @transform_7, window_bounds = array<i64: 8, 128>}]} {
    %c0 = arith.constant 0 : index
    %c0_0 = arith.constant 0 : index
    %0 = vector.load %arg1[%c0, %c0_0] : memref<8x128xbf16, #tpu.memory_space<vmem>>, vector<8x128xbf16>
    %c0_1 = arith.constant 0 : index
    %c0_2 = arith.constant 0 : index
    %1 = vector.load %arg2[%c0_1, %c0_2] : memref<128x128xbf16, #tpu.memory_space<vmem>>, vector<128x128xbf16>
    %cst = arith.constant dense<0.000000e+00> : vector<8x128xf32>
    %2 = tpu.matmul %0, %1, %cst {dimension_numbers = #tpu.dot_dimension_numbers<[1], [0], [0], [1], [0, 0, 1, 1], [], []>} : vector<8x128xbf16>, vector<128x128xbf16>, vector<8x128xf32> -> vector<8x128xf32>
    %c0_3 = arith.constant 0 : index
    %c0_4 = arith.constant 0 : index
    %3 = vector.load %arg3[%c0_3, %c0_4] : memref<1x128xf32, #tpu.memory_space<vmem>>, vector<1x128xf32>
    %4 = vector.broadcast %3 : vector<1x128xf32> to vector<8x128xf32>
    %5 = arith.addf %2, %4 : vector<8x128xf32>
    %cst_5 = arith.constant 0.000000e+00 : f32
    %6 = vector.broadcast %cst_5 : f32 to vector<8x128xf32>
    %7 = arith.maximumf %5, %6 : vector<8x128xf32>
    %8 = arith.truncf %7 : vector<8x128xf32> to vector<8x128xbf16>
    %c0_6 = arith.constant 0 : index
    %c0_7 = arith.constant 0 : index
    %c0_8 = arith.constant 0 : index
    %9 = vector.load %arg4[%c0_6, %c0_7, %c0_8] : memref<2x128x128xbf16, #tpu.memory_space<vmem>>, vector<1x128x128xbf16>
    %10 = vector.shape_cast %9 : vector<1x128x128xbf16> to vector<128x128xbf16>
    %cst_9 = arith.constant dense<0.000000e+00> : vector<8x128xf32>
    %11 = tpu.matmul %8, %10, %cst_9 {dimension_numbers = #tpu.dot_dimension_numbers<[1], [0], [0], [1], [0, 0, 1, 1], [], []>} : vector<8x128xbf16>, vector<128x128xbf16>, vector<8x128xf32> -> vector<8x128xf32>
    %c0_10 = arith.constant 0 : index
    %c0_11 = arith.constant 0 : index
    %c0_12 = arith.constant 0 : index
    %12 = vector.load %arg5[%c0_10, %c0_11, %c0_12] : memref<2x1x128xf32, #tpu.memory_space<vmem>>, vector<1x1x128xf32>
    %13 = vector.shape_cast %12 : vector<1x1x128xf32> to vector<1x128xf32>
    %14 = vector.broadcast %13 : vector<1x128xf32> to vector<8x128xf32>
    %15 = arith.addf %11, %14 : vector<8x128xf32>
    %cst_13 = arith.constant 0.000000e+00 : f32
    %16 = vector.broadcast %cst_13 : f32 to vector<8x128xf32>
    %17 = arith.maximumf %15, %16 : vector<8x128xf32>
    %18 = arith.truncf %17 : vector<8x128xf32> to vector<8x128xbf16>
    %c1 = arith.constant 1 : index
    %c0_14 = arith.constant 0 : index
    %c0_15 = arith.constant 0 : index
    %19 = vector.load %arg4[%c1, %c0_14, %c0_15] : memref<2x128x128xbf16, #tpu.memory_space<vmem>>, vector<1x128x128xbf16>
    %20 = vector.shape_cast %19 : vector<1x128x128xbf16> to vector<128x128xbf16>
    %cst_16 = arith.constant dense<0.000000e+00> : vector<8x128xf32>
    %21 = tpu.matmul %18, %20, %cst_16 {dimension_numbers = #tpu.dot_dimension_numbers<[1], [0], [0], [1], [0, 0, 1, 1], [], []>} : vector<8x128xbf16>, vector<128x128xbf16>, vector<8x128xf32> -> vector<8x128xf32>
    %c1_17 = arith.constant 1 : index
    %c0_18 = arith.constant 0 : index
    %c0_19 = arith.constant 0 : index
    %22 = vector.load %arg5[%c1_17, %c0_18, %c0_19] : memref<2x1x128xf32, #tpu.memory_space<vmem>>, vector<1x1x128xf32>
    %23 = vector.shape_cast %22 : vector<1x1x128xf32> to vector<1x128xf32>
    %24 = vector.broadcast %23 : vector<1x128xf32> to vector<8x128xf32>
    %25 = arith.addf %21, %24 : vector<8x128xf32>
    %cst_20 = arith.constant 0.000000e+00 : f32
    %26 = vector.broadcast %cst_20 : f32 to vector<8x128xf32>
    %27 = arith.maximumf %25, %26 : vector<8x128xf32>
    %28 = arith.truncf %27 : vector<8x128xf32> to vector<8x128xbf16>
    %c0_21 = arith.constant 0 : index
    %c0_22 = arith.constant 0 : index
    %29 = vector.load %arg6[%c0_21, %c0_22] : memref<128x128xbf16, #tpu.memory_space<vmem>>, vector<128x128xbf16>
    %cst_23 = arith.constant dense<0.000000e+00> : vector<8x128xf32>
    %30 = tpu.matmul %28, %29, %cst_23 {dimension_numbers = #tpu.dot_dimension_numbers<[1], [0], [0], [1], [0, 0, 1, 1], [], []>} : vector<8x128xbf16>, vector<128x128xbf16>, vector<8x128xf32> -> vector<8x128xf32>
    %c0_24 = arith.constant 0 : index
    %c0_25 = arith.constant 0 : index
    %31 = vector.load %arg7[%c0_24, %c0_25] : memref<1x128xf32, #tpu.memory_space<vmem>>, vector<1x128xf32>
    %32 = vector.broadcast %31 : vector<1x128xf32> to vector<8x128xf32>
    %33 = arith.addf %30, %32 : vector<8x128xf32>
    %34 = tpu.iota {dimensions = array<i32: 1>} : vector<8x128xi32>
    %c4_i32 = arith.constant 4 : i32
    %35 = vector.broadcast %c4_i32 : i32 to vector<8x128xi32>
    %36 = arith.cmpi slt, %34, %35 : vector<8x128xi32>
    %cst_26 = arith.constant -1.000000e+30 : f32
    %37 = vector.broadcast %cst_26 : f32 to vector<8x128xf32>
    %38 = arith.select %36, %33, %37 : vector<8x128xi1>, vector<8x128xf32>
    %cst_27 = arith.constant dense<0xFF800000> : vector<8xf32>
    %39 = vector.multi_reduction <maximumf>, %38, %cst_27 [1] : vector<8x128xf32> to vector<8xf32>
    %40 = vector.shape_cast %39 : vector<8xf32> to vector<8x1xf32>
    %41 = vector.broadcast %40 : vector<8x1xf32> to vector<8x128xf32>
    %42 = arith.subf %38, %41 : vector<8x128xf32>
    %43 = math.exp %42 : vector<8x128xf32>
    %cst_28 = arith.constant dense<0.000000e+00> : vector<8xf32>
    %44 = vector.multi_reduction <add>, %43, %cst_28 [1] : vector<8x128xf32> to vector<8xf32>
    %45 = vector.shape_cast %44 : vector<8xf32> to vector<8x1xf32>
    %46 = tpu.reciprocal %45 {approx = true} : vector<8x1xf32> -> vector<8x1xf32>
    %47 = vector.broadcast %46 : vector<8x1xf32> to vector<8x128xf32>
    %48 = arith.mulf %43, %47 : vector<8x128xf32>
    %c0_29 = arith.constant 0 : index
    %c0_30 = arith.constant 0 : index
    %49 = vector.load %arg8[%c0_29, %c0_30] : memref<8x128xf32, #tpu.memory_space<vmem>>, vector<8x128xf32>
    tpu.vector_store %arg8[%c0_29, %c0_30], %48 {strides = array<i32>} : memref<8x128xf32, #tpu.memory_space<vmem>>, vector<8x128xf32>,
    return
  }
  func.func @transform_0(%arg0: i32) -> (i32, i32) {
    %c0_i32 = arith.constant 0 : i32
    %c0_i32_0 = arith.constant 0 : i32
    return %arg0, %c0_i32 : i32, i32
  }
  func.func @transform_1(%arg0: i32) -> (i32, i32) {
    %c0_i32 = arith.constant 0 : i32
    %c0_i32_0 = arith.constant 0 : i32
    %c0_i32_1 = arith.constant 0 : i32
    return %c0_i32, %c0_i32_0 : i32, i32
  }
  func.func @transform_2(%arg0: i32) -> (i32, i32) {
    %c0_i32 = arith.constant 0 : i32
    %c0_i32_0 = arith.constant 0 : i32
    %c0_i32_1 = arith.constant 0 : i32
    return %c0_i32, %c0_i32_0 : i32, i32
  }
  func.func @transform_3(%arg0: i32) -> (i32, i32, i32) {
    %c0_i32 = arith.constant 0 : i32
    %c0_i32_0 = arith.constant 0 : i32
    %c0_i32_1 = arith.constant 0 : i32
    %c0_i32_2 = arith.constant 0 : i32
    return %c0_i32, %c0_i32_0, %c0_i32_1 : i32, i32, i32
  }
  func.func @transform_4(%arg0: i32) -> (i32, i32, i32) {
    %c0_i32 = arith.constant 0 : i32
    %c0_i32_0 = arith.constant 0 : i32
    %c0_i32_1 = arith.constant 0 : i32
    %c0_i32_2 = arith.constant 0 : i32
    return %c0_i32, %c0_i32_0, %c0_i32_1 : i32, i32, i32
  }
  func.func @transform_5(%arg0: i32) -> (i32, i32) {
    %c0_i32 = arith.constant 0 : i32
    %c0_i32_0 = arith.constant 0 : i32
    %c0_i32_1 = arith.constant 0 : i32
    return %c0_i32, %c0_i32_0 : i32, i32
  }
  func.func @transform_6(%arg0: i32) -> (i32, i32) {
    %c0_i32 = arith.constant 0 : i32
    %c0_i32_0 = arith.constant 0 : i32
    %c0_i32_1 = arith.constant 0 : i32
    return %c0_i32, %c0_i32_0 : i32, i32
  }
  func.func @transform_7(%arg0: i32) -> (i32, i32) {
    %c0_i32 = arith.constant 0 : i32
    %c0_i32_0 = arith.constant 0 : i32
    return %arg0, %c0_i32 : i32, i32
  }
}

</mosaic_0001>

<llo_original>
// kernel: tpu_custom_call.1
$region0: #{tpu_custom_call.1}
  #allocation0 [shape = 'u32[]', space=smem, size = 0x4, offset = 0x4, fixed_abs, tag = 'smem constant byte address 0x4 - core index']
  #allocation1 [shape = 'u32[144,128]{1,0:T(1,128)}', space=vmem, size = 0x12000, scoped, tag = 'internal scratch']
  %s0 = inlined_call_operand.hbm [shape: bf16[8,128], index: 0, kind: input, shape index: {}]
  %s1 = inlined_call_operand.hbm [shape: bf16[128,128], index: 1, kind: input, shape index: {}]
  %s2 = inlined_call_operand.vmem [shape: f32[1,128], index: 2, kind: input, shape index: {}]
  %s3 = inlined_call_operand.hbm [shape: bf16[2,128,128], index: 3, kind: input, shape index: {}]
  %s4 = inlined_call_operand.vmem [shape: f32[2,1,128], index: 4, kind: input, shape index: {}]
  %s5 = inlined_call_operand.hbm [shape: bf16[128,128], index: 5, kind: input, shape index: {}]
  %s6 = inlined_call_operand.vmem [shape: f32[1,128], index: 6, kind: input, shape index: {}]
  %s7 = inlined_call_operand.hbm [shape: f32[8,128], index: 7, kind: output, shape index: {}]
  %s8 = sld [smem:[#allocation0]]
  $region54: #{tpu_custom_call.1} parent=0
    _
  %s10 = ssub.s32 1, %s8
  %s11 = scalar_select 0, %s10, %s8
  $region1: #{tpu_custom_call.1} parent=0
    #allocation2 [shape = 'u8[2048]{0}', space=vmem, size = 0x800, scoped, tag = 'input window, operand 0, single buffered']
    #allocation3 [shape = 's32[1]{0}', space=sflag, size = 0x4, scoped, tag = 'scoped memory for tpu_custom_call.1']
    #allocation4 [shape = 's32[1]{0}', space=sflag, size = 0x4, scoped, tag = 'scoped memory for tpu_custom_call.1']
    #allocation5 [shape = 'u8[32768]{0}', space=vmem, size = 0x8000, scoped, tag = 'input window, operand 1, single buffered']
    #allocation6 [shape = 's32[1]{0}', space=sflag, size = 0x4, scoped, tag = 'scoped memory for tpu_custom_call.1']
    #allocation7 [shape = 'u8[65536]{0}', space=vmem, size = 0x10000, scoped, tag = 'input window, operand 3, single buffered']
    #allocation8 [shape = 'u8[32768]{0}', space=vmem, size = 0x8000, scoped, tag = 'input window, operand 5, single buffered']
    #allocation9 [shape = 's32[1]{0}', space=sflag, size = 0x4, scoped, tag = 'scoped memory for tpu_custom_call.1']
    #allocation10 [shape = 'u8[4096]{0}', space=vmem, size = 0x1000, scoped, tag = 'output window, operand 0, single buffered']
    %12 = vsyncpa [#allocation3], 0
    %13 = vsyncpa [#allocation6], 0
    %14 = vsyncpa [#allocation9], 0
    %15 = vsyncpa [#allocation4], 0
    // Predicated region
    $region2: #{tpu_custom_call.1} parent=1 // pred_check
      _
    $region3: #{tpu_custom_call.1} parent=1 // pred_check_branch
      %17 = sbr.rel (0) target = $region5
    $region4: #{tpu_custom_call.1} parent=1 // pred_region
      %s19 = ssub.s32 64, 64
      %20 = vsyncadd [#allocation3], %s19
      %s22 = sshll.u32 [#allocation2], 4
      %s23 = int_to_ptr.vmem [resolvable:$true] %s22
      %25 = dma.hbm_to_vmem [thread:$0]  %s0, 64, %s23, [#allocation3]
    $region5: #{tpu_custom_call.1} parent=1 // pred_fallthru
      _
    // Predicated region
    $region6: #{tpu_custom_call.1} parent=1 // pred_check
      _
    $region7: #{tpu_custom_call.1} parent=1 // pred_check_branch
      %27 = sbr.rel (0) target = $region9
    $region8: #{tpu_custom_call.1} parent=1 // pred_region
      %s29 = ssub.s32 1024, 1024
      %30 = vsyncadd [#allocation6], %s29
      %s31 = sshll.u32 [#allocation5], 4
      %s32 = int_to_ptr.vmem [resolvable:$true] %s31
      %37 = dma.hbm_to_vmem [thread:$0]  %s1, 1024, %s32, [#allocation6], 64, 64, 4
    $region9: #{tpu_custom_call.1} parent=1 // pred_fallthru
      _
    // Predicated region
    $region10: #{tpu_custom_call.1} parent=1 // pred_check
      _
    $region11: #{tpu_custom_call.1} parent=1 // pred_check_branch
      %39 = sbr.rel (0) target = $region13
    $region12: #{tpu_custom_call.1} parent=1 // pred_region
      _
    $region13: #{tpu_custom_call.1} parent=1 // pred_fallthru
      _
    // Predicated region
    $region14: #{tpu_custom_call.1} parent=1 // pred_check
      _
    $region15: #{tpu_custom_call.1} parent=1 // pred_check_branch
      %41 = sbr.rel (0) target = $region17
    $region16: #{tpu_custom_call.1} parent=1 // pred_region
      %s43 = ssub.s32 2048, 2048
      %44 = vsyncadd [#allocation6], %s43
      %s45 = sshll.u32 [#allocation7], 4
      %s46 = int_to_ptr.vmem [resolvable:$true] %s45
      %51 = dma.hbm_to_vmem [thread:$0]  %s3, 2048, %s46, [#allocation6], 64, 64, 4
    $region17: #{tpu_custom_call.1} parent=1 // pred_fallthru
      _
    // Predicated region
    $region18: #{tpu_custom_call.1} parent=1 // pred_check
      _
    $region19: #{tpu_custom_call.1} parent=1 // pred_check_branch
      %53 = sbr.rel (0) target = $region21
    $region20: #{tpu_custom_call.1} parent=1 // pred_region
      _
    $region21: #{tpu_custom_call.1} parent=1 // pred_fallthru
      _
    // Predicated region
    $region22: #{tpu_custom_call.1} parent=1 // pred_check
      _
    $region23: #{tpu_custom_call.1} parent=1 // pred_check_branch
      %55 = sbr.rel (0) target = $region25
    $region24: #{tpu_custom_call.1} parent=1 // pred_region
      %s57 = ssub.s32 1024, 1024
      %58 = vsyncadd [#allocation9], %s57
      %s59 = sshll.u32 [#allocation8], 4
      %s60 = int_to_ptr.vmem [resolvable:$true] %s59
      %65 = dma.hbm_to_vmem [thread:$0]  %s5, 1024, %s60, [#allocation9], 64, 64, 4
    $region25: #{tpu_custom_call.1} parent=1 // pred_fallthru
      _
    // Predicated region
    $region26: #{tpu_custom_call.1} parent=1 // pred_check
      _
    $region27: #{tpu_custom_call.1} parent=1 // pred_check_branch
      %67 = sbr.rel (0) target = $region29
    $region28: #{tpu_custom_call.1} parent=1 // pred_region
      _
    $region29: #{tpu_custom_call.1} parent=1 // pred_fallthru
      _
    // Predicated region
    $region30: #{tpu_custom_call.1} parent=1 // pred_check
      _
    $region31: #{tpu_custom_call.1} parent=1 // pred_check_branch
      %69 = sbr.rel (0) target = $region33
    $region32: #{tpu_custom_call.1} parent=1 // pred_region
      %70 = dma.done [#allocation3], 64
    $region33: #{tpu_custom_call.1} parent=1 // pred_fallthru
      _
    // Predicated region
    $region34: #{tpu_custom_call.1} parent=1 // pred_check
      _
    $region35: #{tpu_custom_call.1} parent=1 // pred_check_branch
      %72 = sbr.rel (0) target = $region37
    $region36: #{tpu_custom_call.1} parent=1 // pred_region
      %73 = dma.done [#allocation6], 1024
    $region37: #{tpu_custom_call.1} parent=1 // pred_fallthru
      _
    // Predicated region
    $region38: #{tpu_custom_call.1} parent=1 // pred_check
      _
    $region39: #{tpu_custom_call.1} parent=1 // pred_check_branch
      %75 = sbr.rel (0) target = $region41
    $region40: #{tpu_custom_call.1} parent=1 // pred_region
      %76 = dma.done [#allocation6], 2048
    $region41: #{tpu_custom_call.1} parent=1 // pred_fallthru
      _
    // Predicated region
    $region42: #{tpu_custom_call.1} parent=1 // pred_check
      _
    $region43: #{tpu_custom_call.1} parent=1 // pred_check_branch
      %78 = sbr.rel (0) target = $region45
    $region44: #{tpu_custom_call.1} parent=1 // pred_region
      %79 = dma.done [#allocation9], 1024
    $region45: #{tpu_custom_call.1} parent=1 // pred_fallthru
      _
    %v81 = vld [vmem:[#allocation2] sm:$0xf]
    %v82 = vld [vmem:[#allocation5] sm:$0xf]
    %v83 = vld [vmem:[#allocation5 + $0x4] sm:$0xf]
    %v84 = vld [vmem:[#allocation5 + $0x8] sm:$0xf]
    %v85 = vld [vmem:[#allocation5 + $0xc] sm:$0xf]
    %v86 = vld [vmem:[#allocation5 + $0x10] sm:$0xf]
    %v87 = vld [vmem:[#allocation5 + $0x14] sm:$0xf]
    %v88 = vld [vmem:[#allocation5 + $0x18] sm:$0xf]
    %v89 = vld [vmem:[#allocation5 + $0x1c] sm:$0xf]
    %v90 = vld [vmem:[#allocation5 + $0x20] sm:$0xf]
    %v91 = vld [vmem:[#allocation5 + $0x24] sm:$0xf]
    %v92 = vld [vmem:[#allocation5 + $0x28] sm:$0xf]
    %v93 = vld [vmem:[#allocation5 + $0x2c] sm:$0xf]
    %v94 = vld [vmem:[#allocation5 + $0x30] sm:$0xf]
    %v95 = vld [vmem:[#allocation5 + $0x34] sm:$0xf]
    %v96 = vld [vmem:[#allocation5 + $0x38] sm:$0xf]
    %v97 = vld [vmem:[#allocation5 + $0x3c] sm:$0xf]
    %v98 = vld [vmem:[%s2] sm:$0x1]
    %v100 = vlaneseq
    %v101 = vshrl.u32 %v100, 7
    %v102 = vsub.s32 0, %v101
    %v103 = vrot.slane %v98, %v102
    %v121 = vunpack.c.l.b16 %v82
    %v122 = vunpack.c.l.b16 %v83
    %v123 = vunpack.c.l.b16 %v84
    %v124 = vunpack.c.l.b16 %v85
    %v125 = vunpack.c.l.b16 %v86
    %v126 = vunpack.c.l.b16 %v87
    %v127 = vunpack.c.l.b16 %v88
    %v128 = vunpack.c.l.b16 %v89
    %v129 = vunpack.c.l.b16 %v90
    %v130 = vunpack.c.l.b16 %v91
    %v131 = vunpack.c.l.b16 %v92
    %v132 = vunpack.c.l.b16 %v93
    %v133 = vunpack.c.l.b16 %v94
    %v134 = vunpack.c.l.b16 %v95
    %v135 = vunpack.c.l.b16 %v96
    %v136 = vunpack.c.l.b16 %v97
    %v137 = vpack.c.b16 %v122, %v121
    %v138 = vpack.c.b16 %v124, %v123
    %v139 = vpack.c.b16 %v126, %v125
    %v140 = vpack.c.b16 %v128, %v127
    %v141 = vpack.c.b16 %v130, %v129
    %v142 = vpack.c.b16 %v132, %v131
    %v143 = vpack.c.b16 %v134, %v133
    %v144 = vpack.c.b16 %v136, %v135
    %153 = vmatprep.subr.bf16.mxu0 0
    %154 = vmatpush1.bf16.msra.mxu0 %v137
    %155 = vmatprep.subr.bf16.mxu0 0
    %156 = vmatpush1.bf16.msra.mxu0 %v138
    %157 = vmatprep.subr.bf16.mxu0 0
    %158 = vmatpush1.bf16.msra.mxu0 %v139
    %159 = vmatprep.subr.bf16.mxu0 0
    %160 = vmatpush1.bf16.msra.mxu0 %v140
    %161 = vmatprep.subr.bf16.mxu0 0
    %162 = vmatpush1.bf16.msra.mxu0 %v141
    %163 = vmatprep.subr.bf16.mxu0 0
    %164 = vmatpush1.bf16.msra.mxu0 %v142
    %165 = vmatprep.subr.bf16.mxu0 0
    %166 = vmatpush1.bf16.msra.mxu0 %v143
    %167 = vmatprep.subr.bf16.mxu0 0
    %168 = vmatpush1.bf16.msra.mxu0 %v144
    %169 = vmatprep.subr.bf16.mxu0 0
    %170 = vmatpush1.bf16.msra.mxu0 0
    %171 = vmatprep.subr.bf16.mxu0 0
    %172 = vmatpush1.bf16.msra.mxu0 0
    %173 = vmatprep.subr.bf16.mxu0 0
    %174 = vmatpush1.bf16.msra.mxu0 0
    %175 = vmatprep.subr.bf16.mxu0 0
    %176 = vmatpush1.bf16.msra.mxu0 0
    %177 = vmatprep.subr.bf16.mxu0 0
    %178 = vmatpush1.bf16.msra.mxu0 0
    %179 = vmatprep.subr.bf16.mxu0 0
    %180 = vmatpush1.bf16.msra.mxu0 0
    %181 = vmatprep.subr.bf16.mxu0 0
    %182 = vmatpush1.bf16.msra.mxu0 0
    %183 = vmatprep.subr.bf16.mxu0 0
    %184 = vmatpush1.bf16.msra.mxu0 0
    %185 = vmatprep.mubr.bf16.mxu0 0
    %186 = vmatmul.mubr.bf16.gmra.mrb[0].mxu0 %v81
    %v187 = vpop.f32.mrb[0].mxu0
    %v188 = vadd.f32 %v103, %v187
    %v189 = vpop.f32.mrb[0].mxu0
    %v190 = vpop.f32.mrb[0].mxu0
    %v191 = vpop.f32.mrb[0].mxu0
    %192 = vdwg.mxu0
    %v193 = vmax.f32 %v188, 0.0
    %v194 = vpack.c.bf16 %v193, %v193
    %v195 = vld [vmem:[#allocation7] sm:$0xf]
    %v196 = vld [vmem:[#allocation7 + $0x4] sm:$0xf]
    %v197 = vld [vmem:[#allocation7 + $0x8] sm:$0xf]
    %v198 = vld [vmem:[#allocation7 + $0xc] sm:$0xf]
    %v199 = vld [vmem:[#allocation7 + $0x10] sm:$0xf]
    %v200 = vld [vmem:[#allocation7 + $0x14] sm:$0xf]
    %v201 = vld [vmem:[#allocation7 + $0x18] sm:$0xf]
    %v202 = vld [vmem:[#allocation7 + $0x1c] sm:$0xf]
    %v203 = vld [vmem:[#allocation7 + $0x20] sm:$0xf]
    %v204 = vld [vmem:[#allocation7 + $0x24] sm:$0xf]
    %v205 = vld [vmem:[#allocation7 + $0x28] sm:$0xf]
    %v206 = vld [vmem:[#allocation7 + $0x2c] sm:$0xf]
    %v207 = vld [vmem:[#allocation7 + $0x30] sm:$0xf]
    %v208 = vld [vmem:[#allocation7 + $0x34] sm:$0xf]
    %v209 = vld [vmem:[#allocation7 + $0x38] sm:$0xf]
    %v210 = vld [vmem:[#allocation7 + $0x3c] sm:$0xf]
    %v211 = vld [vmem:[%s4] sm:$0x1]
    %v213 = vlaneseq
    %v214 = vshrl.u32 %v213, 7
    %v215 = vsub.s32 0, %v214
    %v216 = vrot.slane %v211, %v215
    %v234 = vunpack.c.l.b16 %v195
    %v235 = vunpack.c.l.b16 %v196
    %v236 = vunpack.c.l.b16 %v197
    %v237 = vunpack.c.l.b16 %v198
    %v238 = vunpack.c.l.b16 %v199
    %v239 = vunpack.c.l.b16 %v200
    %v240 = vunpack.c.l.b16 %v201
    %v241 = vunpack.c.l.b16 %v202
    %v242 = vunpack.c.l.b16 %v203
    %v243 = vunpack.c.l.b16 %v204
    %v244 = vunpack.c.l.b16 %v205
    %v245 = vunpack.c.l.b16 %v206
    %v246 = vunpack.c.l.b16 %v207
    %v247 = vunpack.c.l.b16 %v208
    %v248 = vunpack.c.l.b16 %v209
    %v249 = vunpack.c.l.b16 %v210
    %v250 = vpack.c.b16 %v235, %v234
    %v251 = vpack.c.b16 %v237, %v236
    %v252 = vpack.c.b16 %v239, %v238
    %v253 = vpack.c.b16 %v241, %v240
    %v254 = vpack.c.b16 %v243, %v242
    %v255 = vpack.c.b16 %v245, %v244
    %v256 = vpack.c.b16 %v247, %v246
    %v257 = vpack.c.b16 %v249, %v248
    %266 = vmatprep.subr.bf16.mxu0 0
    %267 = vmatpush1.bf16.msra.mxu0 %v250
    %268 = vmatprep.subr.bf16.mxu0 0
    %269 = vmatpush1.bf16.msra.mxu0 %v251
    %270 = vmatprep.subr.bf16.mxu0 0
    %271 = vmatpush1.bf16.msra.mxu0 %v252
    %272 = vmatprep.subr.bf16.mxu0 0
    %273 = vmatpush1.bf16.msra.mxu0 %v253
    %274 = vmatprep.subr.bf16.mxu0 0
    %275 = vmatpush1.bf16.msra.mxu0 %v254
    %276 = vmatprep.subr.bf16.mxu0 0
    %277 = vmatpush1.bf16.msra.mxu0 %v255
    %278 = vmatprep.subr.bf16.mxu0 0
    %279 = vmatpush1.bf16.msra.mxu0 %v256
    %280 = vmatprep.subr.bf16.mxu0 0
    %281 = vmatpush1.bf16.msra.mxu0 %v257
    %282 = vmatprep.subr.bf16.mxu0 0
    %283 = vmatpush1.bf16.msra.mxu0 0
    %284 = vmatprep.subr.bf16.mxu0 0
    %285 = vmatpush1.bf16.msra.mxu0 0
    %286 = vmatprep.subr.bf16.mxu0 0
    %287 = vmatpush1.bf16.msra.mxu0 0
    %288 = vmatprep.subr.bf16.mxu0 0
    %289 = vmatpush1.bf16.msra.mxu0 0
    %290 = vmatprep.subr.bf16.mxu0 0
    %291 = vmatpush1.bf16.msra.mxu0 0
    %292 = vmatprep.subr.bf16.mxu0 0
    %293 = vmatpush1.bf16.msra.mxu0 0
    %294 = vmatprep.subr.bf16.mxu0 0
    %295 = vmatpush1.bf16.msra.mxu0 0
    %296 = vmatprep.subr.bf16.mxu0 0
    %297 = vmatpush1.bf16.msra.mxu0 0
    %298 = vmatprep.mubr.bf16.mxu0 0
    %299 = vmatmul.mubr.bf16.gmra.mrb[0].mxu0 %v194
    %v300 = vpop.f32.mrb[0].mxu0
    %v301 = vadd.f32 %v216, %v300
    %v302 = vpop.f32.mrb[0].mxu0
    %v303 = vpop.f32.mrb[0].mxu0
    %v304 = vpop.f32.mrb[0].mxu0
    %305 = vdwg.mxu0
    %v306 = vmax.f32 %v301, 0.0
    %v307 = vpack.c.bf16 %v306, %v306
    %s308 = scalar_lea.vmem [#allocation7], 64
    %v309 = vld [vmem:[%s308] sm:$0xf]
    %v310 = vld [vmem:[%s308 + $0x4] sm:$0xf]
    %v311 = vld [vmem:[%s308 + $0x8] sm:$0xf]
    %v312 = vld [vmem:[%s308 + $0xc] sm:$0xf]
    %v313 = vld [vmem:[%s308 + $0x10] sm:$0xf]
    %v314 = vld [vmem:[%s308 + $0x14] sm:$0xf]
    %v315 = vld [vmem:[%s308 + $0x18] sm:$0xf]
    %v316 = vld [vmem:[%s308 + $0x1c] sm:$0xf]
    %v317 = vld [vmem:[%s308 + $0x20] sm:$0xf]
    %v318 = vld [vmem:[%s308 + $0x24] sm:$0xf]
    %v319 = vld [vmem:[%s308 + $0x28] sm:$0xf]
    %v320 = vld [vmem:[%s308 + $0x2c] sm:$0xf]
    %v321 = vld [vmem:[%s308 + $0x30] sm:$0xf]
    %v322 = vld [vmem:[%s308 + $0x34] sm:$0xf]
    %v323 = vld [vmem:[%s308 + $0x38] sm:$0xf]
    %v324 = vld [vmem:[%s308 + $0x3c] sm:$0xf]
    %s325 = scalar_lea.vmem %s4, 1
    %v326 = vld [vmem:[%s325] sm:$0x1]
    %v328 = vlaneseq
    %v329 = vshrl.u32 %v328, 7
    %v330 = vsub.s32 0, %v329
    %v331 = vrot.slane %v326, %v330
    %v349 = vunpack.c.l.b16 %v309
    %v350 = vunpack.c.l.b16 %v310
    %v351 = vunpack.c.l.b16 %v311
    %v352 = vunpack.c.l.b16 %v312
    %v353 = vunpack.c.l.b16 %v313
    %v354 = vunpack.c.l.b16 %v314
    %v355 = vunpack.c.l.b16 %v315
    %v356 = vunpack.c.l.b16 %v316
    %v357 = vunpack.c.l.b16 %v317
    %v358 = vunpack.c.l.b16 %v318
    %v359 = vunpack.c.l.b16 %v319
    %v360 = vunpack.c.l.b16 %v320
    %v361 = vunpack.c.l.b16 %v321
    %v362 = vunpack.c.l.b16 %v322
    %v363 = vunpack.c.l.b16 %v323
    %v364 = vunpack.c.l.b16 %v324
    %v365 = vpack.c.b16 %v350, %v349
    %v366 = vpack.c.b16 %v352, %v351
    %v367 = vpack.c.b16 %v354, %v353
    %v368 = vpack.c.b16 %v356, %v355
    %v369 = vpack.c.b16 %v358, %v357
    %v370 = vpack.c.b16 %v360, %v359
    %v371 = vpack.c.b16 %v362, %v361
    %v372 = vpack.c.b16 %v364, %v363
    %381 = vmatprep.subr.bf16.mxu0 0
    %382 = vmatpush1.bf16.msra.mxu0 %v365
    %383 = vmatprep.subr.bf16.mxu0 0
    %384 = vmatpush1.bf16.msra.mxu0 %v366
    %385 = vmatprep.subr.bf16.mxu0 0
    %386 = vmatpush1.bf16.msra.mxu0 %v367
    %387 = vmatprep.subr.bf16.mxu0 0
    %388 = vmatpush1.bf16.msra.mxu0 %v368
    %389 = vmatprep.subr.bf16.mxu0 0
    %390 = vmatpush1.bf16.msra.mxu0 %v369
    %391 = vmatprep.subr.bf16.mxu0 0
    %392 = vmatpush1.bf16.msra.mxu0 %v370
    %393 = vmatprep.subr.bf16.mxu0 0
    %394 = vmatpush1.bf16.msra.mxu0 %v371
    %395 = vmatprep.subr.bf16.mxu0 0
    %396 = vmatpush1.bf16.msra.mxu0 %v372
    %397 = vmatprep.subr.bf16.mxu0 0
    %398 = vmatpush1.bf16.msra.mxu0 0
    %399 = vmatprep.subr.bf16.mxu0 0
    %400 = vmatpush1.bf16.msra.mxu0 0
    %401 = vmatprep.subr.bf16.mxu0 0
    %402 = vmatpush1.bf16.msra.mxu0 0
    %403 = vmatprep.subr.bf16.mxu0 0
    %404 = vmatpush1.bf16.msra.mxu0 0
    %405 = vmatprep.subr.bf16.mxu0 0
    %406 = vmatpush1.bf16.msra.mxu0 0
    %407 = vmatprep.subr.bf16.mxu0 0
    %408 = vmatpush1.bf16.msra.mxu0 0
    %409 = vmatprep.subr.bf16.mxu0 0
    %410 = vmatpush1.bf16.msra.mxu0 0
    %411 = vmatprep.subr.bf16.mxu0 0
    %412 = vmatpush1.bf16.msra.mxu0 0
    %413 = vmatprep.mubr.bf16.mxu0 0
    %414 = vmatmul.mubr.bf16.gmra.mrb[0].mxu0 %v307
    %v415 = vpop.f32.mrb[0].mxu0
    %v416 = vadd.f32 %v331, %v415
    %v417 = vpop.f32.mrb[0].mxu0
    %v418 = vpop.f32.mrb[0].mxu0
    %v419 = vpop.f32.mrb[0].mxu0
    %420 = vdwg.mxu0
    %v421 = vmax.f32 %v416, 0.0
    %v422 = vpack.c.bf16 %v421, %v421
    %v423 = vld [vmem:[#allocation8] sm:$0xf]
    %v424 = vld [vmem:[#allocation8 + $0x4] sm:$0xf]
    %v425 = vld [vmem:[#allocation8 + $0x8] sm:$0xf]
    %v426 = vld [vmem:[#allocation8 + $0xc] sm:$0xf]
    %v427 = vld [vmem:[#allocation8 + $0x10] sm:$0xf]
    %v428 = vld [vmem:[#allocation8 + $0x14] sm:$0xf]
    %v429 = vld [vmem:[#allocation8 + $0x18] sm:$0xf]
    %v430 = vld [vmem:[#allocation8 + $0x1c] sm:$0xf]
    %v431 = vld [vmem:[#allocation8 + $0x20] sm:$0xf]
    %v432 = vld [vmem:[#allocation8 + $0x24] sm:$0xf]
    %v433 = vld [vmem:[#allocation8 + $0x28] sm:$0xf]
    %v434 = vld [vmem:[#allocation8 + $0x2c] sm:$0xf]
    %v435 = vld [vmem:[#allocation8 + $0x30] sm:$0xf]
    %v436 = vld [vmem:[#allocation8 + $0x34] sm:$0xf]
    %v437 = vld [vmem:[#allocation8 + $0x38] sm:$0xf]
    %v438 = vld [vmem:[#allocation8 + $0x3c] sm:$0xf]
    %v439 = vld [vmem:[%s6] sm:$0x1]
    %v441 = vlaneseq
    %v442 = vshrl.u32 %v441, 7
    %v443 = vsub.s32 0, %v442
    %v444 = vrot.slane %v439, %v443
    %v462 = vunpack.c.l.b16 %v423
    %v463 = vunpack.c.l.b16 %v424
    %v464 = vunpack.c.l.b16 %v425
    %v465 = vunpack.c.l.b16 %v426
    %v466 = vunpack.c.l.b16 %v427
    %v467 = vunpack.c.l.b16 %v428
    %v468 = vunpack.c.l.b16 %v429
    %v469 = vunpack.c.l.b16 %v430
    %v470 = vunpack.c.l.b16 %v431
    %v471 = vunpack.c.l.b16 %v432
    %v472 = vunpack.c.l.b16 %v433
    %v473 = vunpack.c.l.b16 %v434
    %v474 = vunpack.c.l.b16 %v435
    %v475 = vunpack.c.l.b16 %v436
    %v476 = vunpack.c.l.b16 %v437
    %v477 = vunpack.c.l.b16 %v438
    %v478 = vpack.c.b16 %v463, %v462
    %v479 = vpack.c.b16 %v465, %v464
    %v480 = vpack.c.b16 %v467, %v466
    %v481 = vpack.c.b16 %v469, %v468
    %v482 = vpack.c.b16 %v471, %v470
    %v483 = vpack.c.b16 %v473, %v472
    %v484 = vpack.c.b16 %v475, %v474
    %v485 = vpack.c.b16 %v477, %v476
    %494 = vmatprep.subr.bf16.mxu0 0
    %495 = vmatpush1.bf16.msra.mxu0 %v478
    %496 = vmatprep.subr.bf16.mxu0 0
    %497 = vmatpush1.bf16.msra.mxu0 %v479
    %498 = vmatprep.subr.bf16.mxu0 0
    %499 = vmatpush1.bf16.msra.mxu0 %v480
    %500 = vmatprep.subr.bf16.mxu0 0
    %501 = vmatpush1.bf16.msra.mxu0 %v481
    %502 = vmatprep.subr.bf16.mxu0 0
    %503 = vmatpush1.bf16.msra.mxu0 %v482
    %504 = vmatprep.subr.bf16.mxu0 0
    %505 = vmatpush1.bf16.msra.mxu0 %v483
    %506 = vmatprep.subr.bf16.mxu0 0
    %507 = vmatpush1.bf16.msra.mxu0 %v484
    %508 = vmatprep.subr.bf16.mxu0 0
    %509 = vmatpush1.bf16.msra.mxu0 %v485
    %510 = vmatprep.subr.bf16.mxu0 0
    %511 = vmatpush1.bf16.msra.mxu0 0
    %512 = vmatprep.subr.bf16.mxu0 0
    %513 = vmatpush1.bf16.msra.mxu0 0
    %514 = vmatprep.subr.bf16.mxu0 0
    %515 = vmatpush1.bf16.msra.mxu0 0
    %516 = vmatprep.subr.bf16.mxu0 0
    %517 = vmatpush1.bf16.msra.mxu0 0
    %518 = vmatprep.subr.bf16.mxu0 0
    %519 = vmatpush1.bf16.msra.mxu0 0
    %520 = vmatprep.subr.bf16.mxu0 0
    %521 = vmatpush1.bf16.msra.mxu0 0
    %522 = vmatprep.subr.bf16.mxu0 0
    %523 = vmatpush1.bf16.msra.mxu0 0
    %524 = vmatprep.subr.bf16.mxu0 0
    %525 = vmatpush1.bf16.msra.mxu0 0
    %526 = vmatprep.mubr.bf16.mxu0 0
    %527 = vmatmul.mubr.bf16.gmra.mrb[0].mxu0 %v422
    %v528 = vpop.f32.mrb[0].mxu0
    %v529 = vadd.f32 %v444, %v528
    %v530 = vpop.f32.mrb[0].mxu0
    %v531 = vpop.f32.mrb[0].mxu0
    %v532 = vpop.f32.mrb[0].mxu0
    %533 = vdwg.mxu0
    %v534 = vlaneseq
    %v535 = vand.u32 %v534, 127
    %vm536 = vcmp.lt.s32.totalorder %v535, 4
    %v537 = vsel %vm536, %v529, -1e+30
    %538 = vmax.xlane.f32.xlu0 %v537
    %v539 = vpop.xlane.xlu0 %538
    %v540 = vsub.f32 %v537, %v539
    %v541 = vmul.f32 %v540, 1.442695
    %v542 = vpow.pop %v541
    %543 = vadd.xlane.f32.xlu0 %v542
    %v544 = vpop.xlane.xlu0 %543
    %v545 = vrcp.pop %v544
    %v546 = vmul.f32 %v542, %v545
    %547 = vst [vmem:[#allocation10] sm:$0xff] %v546
    // Predicated region
    $region46: #{tpu_custom_call.1} parent=1 // pred_check
      _
    $region47: #{tpu_custom_call.1} parent=1 // pred_check_branch
      %549 = sbr.rel (0) target = $region49
    $region48: #{tpu_custom_call.1} parent=1 // pred_region
      %s551 = ssub.s32 128, 128
      %552 = vsyncadd [#allocation4], %s551
      %s554 = sshll.u32 [#allocation10], 4
      %s555 = int_to_ptr.vmem [resolvable:$true] %s554
      %557 = dma.vmem_to_hbm [thread:$0]  %s555, 128, %s7, [#allocation4]
    $region49: #{tpu_custom_call.1} parent=1 // pred_fallthru
      _
    // Predicated region
    $region50: #{tpu_custom_call.1} parent=1 // pred_check
      _
    $region51: #{tpu_custom_call.1} parent=1 // pred_check_branch
      %559 = sbr.rel (0) target = $region53
    $region52: #{tpu_custom_call.1} parent=1 // pred_region
      %560 = dma.done [#allocation4], 128
    $region53: #{tpu_custom_call.1} parent=1 // pred_fallthru
      _
    %561 = vsyncpa [#allocation3], 1
    %562 = vsyncpa [#allocation6], 1
    %563 = vsyncpa [#allocation9], 1
    %564 = vsyncpa [#allocation4], 1

</llo_original>
